<compile_context>
chip_gen: v7x
topology: tpu7x:2x2x1
jax: 0.10.0
libtpu: 0.0.40
codegen_flags: <defaults>
</compile_context>

<pallas_src>
import functools
import numpy as np

import jax
import jax.numpy as jnp
from jax.experimental import pallas as pl
from jax.experimental.pallas import tpu as pltpu


_TM_MAX = 512                       # max row tile (weights are VMEM-resident,
                                    # so TM no longer has to amortize weight DMA)
_VMEM_LIMIT = 48 * 1024 * 1024      # safe on v5e/v6e (128 MiB) and v7x (64 MiB)


def _gelu(x):
    # tanh-approximate GELU: tanh runs on the EUP slot instead of a long erf
    # VALU polynomial (small, systematic deviation vs torch's exact GELU).
    c0 = jnp.float32(0.7978845608028654)
    c1 = jnp.float32(0.044715)
    return 0.5 * x * (1.0 + jnp.tanh(c0 * (x + c1 * x * x * x)))


def _round_up(v, m):
    return ((v + m - 1) // m) * m


def _m_tiling(M, tm_max=_TM_MAX):
    """(TM, Mp): one tile when the (8-rounded) M is small, else tm_max tiles."""
    Mp8 = _round_up(max(M, 8), 8)
    if Mp8 <= tm_max:
        return Mp8, Mp8
    return tm_max, _round_up(Mp8, tm_max)


# ----------------------------------------------------------------------------
# The single generic kernel: chain of (optional GELU -> bf16 matmul -> +bias)
# layers, optional residual add after a chosen stage. Layer loop is unrolled,
# all weights/biases are VMEM-resident (constant index_map), grid over M only.
# ----------------------------------------------------------------------------
def _chain_kernel(*refs, gelu_flags, residual_after):
    n_stages = len(gelu_flags)
    x_ref = refs[0]
    out_ref = refs[-1]
    y = x_ref[...].astype(jnp.float32)
    for i in range(n_stages):
        w_ref = refs[1 + 2 * i]
        b_ref = refs[2 + 2 * i]
        xin = _gelu(y) if gelu_flags[i] else y
        y = jnp.dot(xin.astype(jnp.bfloat16), w_ref[...],
                    preferred_element_type=jnp.float32) + b_ref[...]
        if residual_after == i:                       # static python check
            y = y + refs[1 + 2 * n_stages][...].astype(jnp.float32)
    out_ref[...] = y.astype(out_ref.dtype)


def fused_chain(x, stages, residual=None, residual_after=None,
                out_dtype=jnp.bfloat16):
    """y = chain of layers over x; layer i: (gelu?) -> @W_i -> +b_i.

    x:        [M, K0]   (f32 or bf16)
    stages:   list of (W [K_i, N_i] bf16, b [1, N_i] f32, gelu_before: bool),
              with N_i == K_{i+1}.
    residual: optional [M, N_{residual_after}], added right after that stage.
    """
    M, K0 = x.shape
    assert stages, "need at least one stage"
    assert stages[0][0].shape[0] == K0
    for i in range(1, len(stages)):
        assert stages[i][0].shape[0] == stages[i - 1][0].shape[1]
    n_out = stages[-1][0].shape[1]

    TM, Mp = _m_tiling(M)
    xp = x if Mp == M else jnp.pad(x, ((0, Mp - M), (0, 0)))

    in_specs = [pl.BlockSpec((TM, K0), lambda i: (i, 0))]
    args = [xp]
    for (w, b, _) in stages:
        # constant index_map -> weight/bias resident in VMEM for the whole call
        in_specs.append(pl.BlockSpec(w.shape, lambda i: (0, 0)))
        in_specs.append(pl.BlockSpec(b.shape, lambda i: (0, 0)))
        args += [w, b]
    if residual is not None:
        assert residual_after is not None
        c_res = stages[residual_after][0].shape[1]
        assert residual.shape == (M, c_res)
        rp = residual if Mp == M else jnp.pad(residual, ((0, Mp - M), (0, 0)))
        in_specs.append(pl.BlockSpec((TM, c_res), lambda i: (i, 0)))
        args.append(rp)
    else:
        residual_after = None

    gelu_flags = tuple(bool(g) for (_, _, g) in stages)
    out = pl.pallas_call(
        functools.partial(_chain_kernel, gelu_flags=gelu_flags,
                          residual_after=residual_after),
        out_shape=jax.ShapeDtypeStruct((Mp, n_out), out_dtype),
        grid_spec=pltpu.PrefetchScalarGridSpec(
            num_scalar_prefetch=0,
            grid=(Mp // TM,),
            in_specs=in_specs,
            out_specs=pl.BlockSpec((TM, n_out), lambda i: (i, 0)),
        ),
        compiler_params=pltpu.CompilerParams(
            dimension_semantics=("parallel",),
            vmem_limit_bytes=_VMEM_LIMIT),
    )(*args)
    return out if Mp == M else out[:M]


# ----------------------------------------------------------------------------
# Parameter initialization (deterministic, synthetic, token-packed layout)
# ----------------------------------------------------------------------------
def init_params(key, num_vocab, embed_dim, head_dim, n_layer, conv_size):
    keys = iter(jax.random.split(key, 256))
    H = head_dim

    def rnd(shape, scale=0.1):
        return np.array(scale * jax.random.normal(next(keys), shape, jnp.float32))

    p = {"num_vocab": num_vocab, "head_dim": H}

    emb = rnd((num_vocab + 1, H))
    emb[0] = 0.0                                   # padding_idx=0
    p["embed"] = jnp.asarray(emb, jnp.float32)

    def make_linear_packed(ci, co, s):
        # per-token Linear / Conv1d(k=1) expressed block-diagonally in the
        # s-token packed layout: [s*ci, s*co], same [ci,co] on every block.
        w = rnd((ci, co))
        b = rnd((co,))
        W = np.zeros((s * ci, s * co), np.float32)
        for j in range(s):
            W[j * ci:(j + 1) * ci, j * co:(j + 1) * co] = w
        B = np.tile(b, s)[None, :]
        return jnp.asarray(W, jnp.bfloat16), jnp.asarray(B, jnp.float32)

    def make_block_conv(s):
        # strictly-causal mixing inside a block of s tokens: output token k
        # sees input tokens j < k only.
        W = np.zeros((s * H, s * H), np.float32)
        B = np.zeros((1, s * H), np.float32)
        w_off = rnd((s, H, H))
        b = rnd((H,))
        for j in range(s):
            for k in range(j + 1, s):
                W[j * H:(j + 1) * H, k * H:(k + 1) * H] = w_off[j]
            B[0, j * H:(j + 1) * H] = b
        return jnp.asarray(W, jnp.bfloat16), jnp.asarray(B, jnp.float32)

    def make_deconv(c_in, s):
        # ConvTranspose1d(k=s, stride=s) -> [c_in, s*H], offset-major columns.
        W = np.zeros((c_in, s * H), np.float32)
        B = np.zeros((1, s * H), np.float32)
        w_off = rnd((s, c_in, H))
        b = rnd((H,))
        for j in range(s):
            W[:, j * H:(j + 1) * H] = w_off[j]
            B[0, j * H:(j + 1) * H] = b
        return jnp.asarray(W, jnp.bfloat16), jnp.asarray(B, jnp.float32)

    def make_down(s):
        # Conv1d(k=s, stride=s) -> [s*H, H], offset-major rows.
        W = np.zeros((s * H, H), np.float32)
        w_off = rnd((s, H, H))
        b = rnd((H,))
        for j in range(s):
            W[j * H:(j + 1) * H, :] = w_off[j]
        return {"w": jnp.asarray(W, jnp.bfloat16),
                "b": jnp.asarray(b[None, :], jnp.float32)}

    def make_deconv_block(c_in, s):
        w, b = make_deconv(c_in, s)
        tail = [make_linear_packed(H, H, s) for _ in range(n_layer - 1)]
        return {"w": w, "b": b, "tail": tail}

    p["deconv_2"] = make_deconv_block(embed_dim, conv_size)
    p["deconv_1"] = make_deconv_block(H, 8)
    p["deconv_0"] = make_deconv_block(H, 8)

    p["conv_2"] = [make_block_conv(conv_size) for _ in range(n_layer)]
    p["conv_1"] = [make_block_conv(8) for _ in range(n_layer)]
    p["conv_0"] = [make_block_conv(8) for _ in range(n_layer)]

    p["down_1"] = make_down(8)
    p["down_0"] = make_down(8)

    # final linear head, in the 8-token packed layout of level 0
    lin = [make_linear_packed(H, H, 8) for _ in range(n_layer - 1)]
    lin += [make_linear_packed(H, num_vocab, 8)]
    p["linear"] = lin
    return p


# ----------------------------------------------------------------------------
# DoubleSubstitutionHead.forward
# ----------------------------------------------------------------------------
def double_substitution_head_forward(p, x, value, depth, pos, *, conv_size):
    H = p["head_dim"]
    V = p["num_vocab"]

    # ----- glue: static sequence-structure bookkeeping (host side) -----------
    # The reference PyTorch code uses these counts as tensor shapes / slice
    # bounds, which implicitly requires identical per-batch values; we assert
    # that (instead of silently using row 0) and treat them as static ints.
    value_np = np.asarray(value)
    depth_np = np.asarray(depth)
    N = value_np.shape[0]
    max_depth = int(depth_np.max())
    len_0_all = (depth_np == max_depth).sum(axis=1)
    len_1_all = (depth_np == max_depth - 1).sum(axis=1)
    len_2_all = (depth_np == max_depth - 2).sum(axis=1)
    assert (len_0_all == len_0_all[0]).all(), "per-batch len_0 must match"
    assert (len_1_all == len_1_all[0]).all(), "per-batch len_1 must match"
    assert (len_2_all == len_2_all[0]).all(), "per-batch len_2 must match"
    len_0, len_1, len_2 = int(len_0_all[0]), int(len_1_all[0]), int(len_2_all[0])
    assert (depth_np[:, -len_0:] == max_depth).all()

    val_2 = value_np[:, :len_2]
    val_1 = value_np[:, len_2:len_2 + len_1]
    mask_2 = val_2 == 2
    mask_1 = val_1 == 2
    mix_2_all = mask_2.sum(axis=1)
    mix_1_all = mask_1.sum(axis=1)
    assert (mix_2_all == mix_2_all[0]).all(), "per-batch mix_2 must match"
    assert (mix_1_all == mix_1_all[0]).all(), "per-batch mix_1 must match"
    mix_2, mix_1 = int(mix_2_all[0]), int(mix_1_all[0])

    T2 = x.shape[1]
    assert len_2 == conv_size * T2, "deconv_2 output length must equal len_2"
    assert len_1 == 8 * mix_2, "deconv_1 output length must equal len_1"
    assert len_0 >= 8 * mix_1

    idx_2 = np.stack([np.nonzero(mask_2[i])[0] for i in range(N)])   # [N, mix_2]
    idx_1 = np.stack([np.nonzero(mask_1[i])[0] for i in range(N)])   # [N, mix_1]
    rows = np.arange(N)[:, None]

    # ----- value embedding of the last layer (bf16 activations downstream) ---
    emb_0 = jnp.take(p["embed"], jnp.asarray(value_np[:, -len_0:]),
                     axis=0).astype(jnp.bfloat16)                    # [N, len_0, H]
    # spatial_encoding is None -> skipped

    e0_in = emb_0[:, :mix_1 * 8].reshape(N * mix_1, 8 * H)           # packed

    # emb_1[val_1==2] = down_convolution_0(emb_0[:, :mix_1*8])
    d0 = fused_chain(e0_in, [(p["down_0"]["w"], p["down_0"]["b"], False)],
                     out_dtype=jnp.bfloat16)                         # [N*mix_1, H]
    emb_1 = (jnp.zeros((N, len_1, H), jnp.bfloat16)
             .at[rows, idx_1].set(d0.reshape(N, mix_1, H)))

    # emb_2[val_2==2] = down_convolution_1(emb_1)
    d1 = fused_chain(emb_1.reshape(N * (len_1 // 8), 8 * H),
                     [(p["down_1"]["w"], p["down_1"]["b"], False)],
                     out_dtype=jnp.bfloat16)                         # [N*mix_2, H]
    emb_2 = (jnp.zeros((N, len_2, H), jnp.bfloat16)
             .at[rows, idx_2].set(d1.reshape(N, len_1 // 8, H)))

    # ----- BlockConvolution stacks (each stack = ONE fused pallas_call) ------
    e0 = fused_chain(e0_in,
                     [(w, b, (l > 0)) for l, (w, b) in enumerate(p["conv_0"])],
                     out_dtype=jnp.bfloat16)                         # [N*mix_1, 8H]
    e1 = fused_chain(emb_1.reshape(N * mix_2, 8 * H),
                     [(w, b, True) for (w, b) in p["conv_1"]],
                     out_dtype=jnp.bfloat16)                         # [N*mix_2, 8H]
    e2 = fused_chain(emb_2.reshape(N * T2, conv_size * H),
                     [(w, b, True) for (w, b) in p["conv_2"]],
                     out_dtype=jnp.bfloat16)                         # [N*T2, cs*H]

    # ----- level 2: deconv_2 + 1x1 tail + residual e2 (one call) -------------
    stages_2 = ([(p["deconv_2"]["w"], p["deconv_2"]["b"], True)]
                + [(w, b, True) for (w, b) in p["deconv_2"]["tail"]])
    y2 = fused_chain(x.reshape(N * T2, -1).astype(jnp.float32), stages_2,
                     residual=e2, residual_after=len(stages_2) - 1,
                     out_dtype=jnp.bfloat16)                         # [N*T2, cs*H]
    x1 = y2.reshape(N, len_2, H)[rows, idx_2].reshape(N * mix_2, H)  # mixed rows

    # ----- level 1: deconv_1 + 1x1 tail + residual e1 (one call) -------------
    stages_1 = ([(p["deconv_1"]["w"], p["deconv_1"]["b"], True)]
                + [(w, b, True) for (w, b) in p["deconv_1"]["tail"]])
    y1 = fused_chain(x1, stages_1, residual=e1,
                     residual_after=len(stages_1) - 1,
                     out_dtype=jnp.bfloat16)                         # [N*mix_2, 8H]
    x0 = y1.reshape(N, len_1, H)[rows, idx_1].reshape(N * mix_1, H)

    # ----- level 0: deconv_0 + tail + residual e0 + final linear head --------
    # (all fused in ONE pallas_call; logits come out packed as [M, 8*V])
    stages_0 = ([(p["deconv_0"]["w"], p["deconv_0"]["b"], True)]
                + [(w, b, True) for (w, b) in p["deconv_0"]["tail"]])
    res_after = len(stages_0) - 1
    stages_0 += [(w, b, True) for (w, b) in p["linear"]]
    out = fused_chain(x0, stages_0, residual=e0, residual_after=res_after,
                      out_dtype=jnp.float32)                         # [N*mix_1, 8V]
    return out.reshape(N, mix_1 * 8, V)
    # TODO(synk): for a v7x-only build, stack weights could be stored fp8 to
    # halve weight DMA once M grows enough to matter (not done here).


# ----------------------------------------------------------------------------
if __name__ == "__main__":
    # small but consistent configuration
    num_vocab, embed_dim, head_dim, n_layer, conv_size = 16, 32, 32, 2, 4
    batch = 2
    T2 = 2                        # transformer latent length
    len_2 = T2 * conv_size        # 8 tokens at depth max-2
    mix_2 = 2
    len_1 = mix_2 * 8             # 16 tokens at depth max-1
    mix_1 = 2
    len_0 = mix_1 * 8             # 16 tokens at depth max
    seq_len = len_2 + len_1 + len_0

    key = jax.random.PRNGKey(0)
    k_param, k_x, k_v0 = jax.random.split(key, 3)

    params = init_params(k_param, num_vocab, embed_dim, head_dim, n_layer, conv_size)

    # transformer latent x: [N, T'', E]
    x = jax.random.normal(k_x, (batch, T2, embed_dim), jnp.float32)

    # value / depth / pos token sequences (layers at depth d-2, d-1, d)
    depth_row = [1] * len_2 + [2] * len_1 + [3] * len_0
    depth = jnp.asarray(np.stack([depth_row, depth_row]), jnp.int32)

    val2_b0 = [1, 2, 3, 1, 1, 2, 3, 1]             # two mixed (==2) tokens
    val2_b1 = [3, 1, 2, 1, 1, 1, 2, 3]
    val1_b0 = [1] * len_1
    val1_b0[3], val1_b0[10] = 2, 2                 # two mixed tokens
    val1_b1 = [3] * len_1
    val1_b1[0], val1_b1[12] = 2, 2
    val0 = np.asarray(jax.random.randint(k_v0, (batch, len_0), 1, num_vocab + 1))
    value = jnp.asarray(
        np.stack([np.concatenate([val2_b0, val1_b0, val0[0]]),
                  np.concatenate([val2_b1, val1_b1, val0[1]])]), jnp.int32)

    pos = jnp.zeros((batch, seq_len, 3), jnp.int32)  # unused (spatial_encoding=None)

    # ---- sanity check of the fused chain kernel against plain jnp -----------
    def chain_ref(xv, stages, residual=None, residual_after=None):
        y = xv.astype(jnp.float32)
        for i, (w, b, g) in enumerate(stages):
            xin = _gelu(y) if g else y
            y = jnp.dot(xin.astype(jnp.bfloat16), w,
                        preferred_element_type=jnp.float32) + b
            if residual is not None and residual_after == i:
                y = y + residual.astype(jnp.float32)
        return y

    kt = jax.random.split(jax.random.PRNGKey(1), 8)
    xt = jax.random.normal(kt[0], (40, 128), jnp.float32)
    w0 = (0.2 * jax.random.normal(kt[1], (128, 256), jnp.float32)).astype(jnp.bfloat16)
    b0 = 0.2 * jax.random.normal(kt[2], (1, 256), jnp.float32)
    w1 = (0.2 * jax.random.normal(kt[3], (256, 256), jnp.float32)).astype(jnp.bfloat16)
    b1 = 0.2 * jax.random.normal(kt[4], (1, 256), jnp.float32)
    w2 = (0.2 * jax.random.normal(kt[5], (256, 128), jnp.float32)).astype(jnp.bfloat16)
    b2 = 0.2 * jax.random.normal(kt[6], (1, 128), jnp.float32)
    rt = jax.random.normal(kt[7], (40, 256), jnp.float32).astype(jnp.bfloat16)
    test_stages = [(w0, b0, False), (w1, b1, True), (w2, b2, True)]
    got = fused_chain(xt, test_stages, residual=rt, residual_after=1,
                      out_dtype=jnp.float32)
    want = chain_ref(xt, test_stages, residual=rt, residual_after=1)
    np.testing.assert_allclose(np.asarray(got), np.asarray(want),
                               rtol=2e-2, atol=2e-2)

    # ---- run the full head ---------------------------------------------------
    logits = double_substitution_head_forward(params, x, value, depth, pos,
                                              conv_size=conv_size)
    logits = jax.block_until_ready(logits)
    assert logits.shape == (batch, mix_1 * 8, num_vocab), logits.shape
    assert bool(jnp.isfinite(logits).all())
    print("KERNEL_OK")
</pallas_src>

<mosaic_0001>
module attributes {stable_mosaic.version = 11 : i64} {
  func.func @_chain_kernel(%arg0: i32, %arg1: memref<40x128xf32, #tpu.memory_space<vmem>>, %arg2: memref<128x256xbf16, #tpu.memory_space<vmem>>, %arg3: memref<1x256xf32, #tpu.memory_space<vmem>>, %arg4: memref<256x256xbf16, #tpu.memory_space<vmem>>, %arg5: memref<1x256xf32, #tpu.memory_space<vmem>>, %arg6: memref<256x128xbf16, #tpu.memory_space<vmem>>, %arg7: memref<1x128xf32, #tpu.memory_space<vmem>>, %arg8: memref<40x256xbf16, #tpu.memory_space<vmem>>, %arg9: memref<40x128xf32, #tpu.memory_space<vmem>>) attributes {dimension_semantics = [#tpu.dimension_semantics<parallel>], iteration_bounds = array<i64: 1>, scalar_prefetch = 0 : i64, scratch_operands = 0 : i64, tpu.core_type = #tpu.core_type<tc>, window_params = [{transform_indices = @transform_0, window_bounds = array<i64: 40, 128>}, {pipeline_mode = #tpu.pipeline_mode<synchronous>, transform_indices = @transform_1, window_bounds = array<i64: 128, 256>}, {pipeline_mode = #tpu.pipeline_mode<synchronous>, transform_indices = @transform_2, window_bounds = array<i64: 1, 256>}, {pipeline_mode = #tpu.pipeline_mode<synchronous>, transform_indices = @transform_3, window_bounds = array<i64: 256, 256>}, {pipeline_mode = #tpu.pipeline_mode<synchronous>, transform_indices = @transform_4, window_bounds = array<i64: 1, 256>}, {pipeline_mode = #tpu.pipeline_mode<synchronous>, transform_indices = @transform_5, window_bounds = array<i64: 256, 128>}, {pipeline_mode = #tpu.pipeline_mode<synchronous>, transform_indices = @transform_6, window_bounds = array<i64: 1, 128>}, {transform_indices = @transform_7, window_bounds = array<i64: 40, 256>}, {transform_indices = @transform_8, window_bounds = array<i64: 40, 128>}]} {
    %c0 = arith.constant 0 : index
    %c0_0 = arith.constant 0 : index
    %0 = vector.load %arg1[%c0, %c0_0] : memref<40x128xf32, #tpu.memory_space<vmem>>, vector<40x128xf32>
    %1 = arith.truncf %0 : vector<40x128xf32> to vector<40x128xbf16>
    %c0_1 = arith.constant 0 : index
    %c0_2 = arith.constant 0 : index
    %2 = vector.load %arg2[%c0_1, %c0_2] : memref<128x256xbf16, #tpu.memory_space<vmem>>, vector<128x256xbf16>
    %cst = arith.constant dense<0.000000e+00> : vector<40x256xf32>
    %3 = tpu.matmul %1, %2, %cst {dimension_numbers = #tpu.dot_dimension_numbers<[1], [0], [0], [1], [0, 0, 1, 1], [], []>} : vector<40x128xbf16>, vector<128x256xbf16>, vector<40x256xf32> -> vector<40x256xf32>
    %c0_3 = arith.constant 0 : index
    %c0_4 = arith.constant 0 : index
    %4 = vector.load %arg3[%c0_3, %c0_4] : memref<1x256xf32, #tpu.memory_space<vmem>>, vector<1x256xf32>
    %5 = vector.broadcast %4 : vector<1x256xf32> to vector<40x256xf32>
    %6 = arith.addf %3, %5 : vector<40x256xf32>
    %cst_5 = arith.constant 5.000000e-01 : f32
    %7 = vector.broadcast %cst_5 : f32 to vector<40x256xf32>
    %8 = arith.mulf %7, %6 : vector<40x256xf32>
    %cst_6 = arith.constant 4.471500e-02 : f32
    %9 = vector.broadcast %cst_6 : f32 to vector<40x256xf32>
    %10 = arith.mulf %9, %6 : vector<40x256xf32>
    %11 = arith.mulf %10, %6 : vector<40x256xf32>
    %12 = arith.mulf %11, %6 : vector<40x256xf32>
    %13 = arith.addf %6, %12 : vector<40x256xf32>
    %cst_7 = arith.constant 0.797884583 : f32
    %14 = vector.broadcast %cst_7 : f32 to vector<40x256xf32>
    %15 = arith.mulf %14, %13 : vector<40x256xf32>
    %16 = math.tanh %15 : vector<40x256xf32>
    %cst_8 = arith.constant 1.000000e+00 : f32
    %17 = vector.broadcast %cst_8 : f32 to vector<40x256xf32>
    %18 = arith.addf %17, %16 : vector<40x256xf32>
    %19 = arith.mulf %8, %18 : vector<40x256xf32>
    %20 = arith.truncf %19 : vector<40x256xf32> to vector<40x256xbf16>
    %c0_9 = arith.constant 0 : index
    %c0_10 = arith.constant 0 : index
    %21 = vector.load %arg4[%c0_9, %c0_10] : memref<256x256xbf16, #tpu.memory_space<vmem>>, vector<256x256xbf16>
    %cst_11 = arith.constant dense<0.000000e+00> : vector<40x256xf32>
    %22 = tpu.matmul %20, %21, %cst_11 {dimension_numbers = #tpu.dot_dimension_numbers<[1], [0], [0], [1], [0, 0, 1, 1], [], []>} : vector<40x256xbf16>, vector<256x256xbf16>, vector<40x256xf32> -> vector<40x256xf32>
    %c0_12 = arith.constant 0 : index
    %c0_13 = arith.constant 0 : index
    %23 = vector.load %arg5[%c0_12, %c0_13] : memref<1x256xf32, #tpu.memory_space<vmem>>, vector<1x256xf32>
    %24 = vector.broadcast %23 : vector<1x256xf32> to vector<40x256xf32>
    %25 = arith.addf %22, %24 : vector<40x256xf32>
    %c0_14 = arith.constant 0 : index
    %c0_15 = arith.constant 0 : index
    %26 = vector.load %arg8[%c0_14, %c0_15] : memref<40x256xbf16, #tpu.memory_space<vmem>>, vector<40x256xbf16>
    %27 = arith.extf %26 : vector<40x256xbf16> to vector<40x256xf32>
    %28 = arith.addf %25, %27 : vector<40x256xf32>
    %cst_16 = arith.constant 5.000000e-01 : f32
    %29 = vector.broadcast %cst_16 : f32 to vector<40x256xf32>
    %30 = arith.mulf %29, %28 : vector<40x256xf32>
    %cst_17 = arith.constant 4.471500e-02 : f32
    %31 = vector.broadcast %cst_17 : f32 to vector<40x256xf32>
    %32 = arith.mulf %31, %28 : vector<40x256xf32>
    %33 = arith.mulf %32, %28 : vector<40x256xf32>
    %34 = arith.mulf %33, %28 : vector<40x256xf32>
    %35 = arith.addf %28, %34 : vector<40x256xf32>
    %cst_18 = arith.constant 0.797884583 : f32
    %36 = vector.broadcast %cst_18 : f32 to vector<40x256xf32>
    %37 = arith.mulf %36, %35 : vector<40x256xf32>
    %38 = math.tanh %37 : vector<40x256xf32>
    %cst_19 = arith.constant 1.000000e+00 : f32
    %39 = vector.broadcast %cst_19 : f32 to vector<40x256xf32>
    %40 = arith.addf %39, %38 : vector<40x256xf32>
    %41 = arith.mulf %30, %40 : vector<40x256xf32>
    %42 = arith.truncf %41 : vector<40x256xf32> to vector<40x256xbf16>
    %c0_20 = arith.constant 0 : index
    %c0_21 = arith.constant 0 : index
    %43 = vector.load %arg6[%c0_20, %c0_21] : memref<256x128xbf16, #tpu.memory_space<vmem>>, vector<256x128xbf16>
    %cst_22 = arith.constant dense<0.000000e+00> : vector<40x128xf32>
    %44 = tpu.matmul %42, %43, %cst_22 {dimension_numbers = #tpu.dot_dimension_numbers<[1], [0], [0], [1], [0, 0, 1, 1], [], []>} : vector<40x256xbf16>, vector<256x128xbf16>, vector<40x128xf32> -> vector<40x128xf32>
    %c0_23 = arith.constant 0 : index
    %c0_24 = arith.constant 0 : index
    %45 = vector.load %arg7[%c0_23, %c0_24] : memref<1x128xf32, #tpu.memory_space<vmem>>, vector<1x128xf32>
    %46 = vector.broadcast %45 : vector<1x128xf32> to vector<40x128xf32>
    %47 = arith.addf %44, %46 : vector<40x128xf32>
    %c0_25 = arith.constant 0 : index
    %c0_26 = arith.constant 0 : index
    %48 = vector.load %arg9[%c0_25, %c0_26] : memref<40x128xf32, #tpu.memory_space<vmem>>, vector<40x128xf32>
    tpu.vector_store %arg9[%c0_25, %c0_26], %47 {strides = array<i32>} : memref<40x128xf32, #tpu.memory_space<vmem>>, vector<40x128xf32>,
    return
  }
  func.func @transform_0(%arg0: i32) -> (i32, i32) {
    %c0_i32 = arith.constant 0 : i32
    %c0_i32_0 = arith.constant 0 : i32
    return %arg0, %c0_i32 : i32, i32
  }
  func.func @transform_1(%arg0: i32) -> (i32, i32) {
    %c0_i32 = arith.constant 0 : i32
    %c0_i32_0 = arith.constant 0 : i32
    %c0_i32_1 = arith.constant 0 : i32
    return %c0_i32, %c0_i32_0 : i32, i32
  }
  func.func @transform_2(%arg0: i32) -> (i32, i32) {
    %c0_i32 = arith.constant 0 : i32
    %c0_i32_0 = arith.constant 0 : i32
    %c0_i32_1 = arith.constant 0 : i32
    return %c0_i32, %c0_i32_0 : i32, i32
  }
  func.func @transform_3(%arg0: i32) -> (i32, i32) {
    %c0_i32 = arith.constant 0 : i32
    %c0_i32_0 = arith.constant 0 : i32
    %c0_i32_1 = arith.constant 0 : i32
    return %c0_i32, %c0_i32_0 : i32, i32
  }
  func.func @transform_4(%arg0: i32) -> (i32, i32) {
    %c0_i32 = arith.constant 0 : i32
    %c0_i32_0 = arith.constant 0 : i32
    %c0_i32_1 = arith.constant 0 : i32
    return %c0_i32, %c0_i32_0 : i32, i32
  }
  func.func @transform_5(%arg0: i32) -> (i32, i32) {
    %c0_i32 = arith.constant 0 : i32
    %c0_i32_0 = arith.constant 0 : i32
    %c0_i32_1 = arith.constant 0 : i32
    return %c0_i32, %c0_i32_0 : i32, i32
  }
  func.func @transform_6(%arg0: i32) -> (i32, i32) {
    %c0_i32 = arith.constant 0 : i32
    %c0_i32_0 = arith.constant 0 : i32
    %c0_i32_1 = arith.constant 0 : i32
    return %c0_i32, %c0_i32_0 : i32, i32
  }
  func.func @transform_7(%arg0: i32) -> (i32, i32) {
    %c0_i32 = arith.constant 0 : i32
    %c0_i32_0 = arith.constant 0 : i32
    return %arg0, %c0_i32 : i32, i32
  }
  func.func @transform_8(%arg0: i32) -> (i32, i32) {
    %c0_i32 = arith.constant 0 : i32
    %c0_i32_0 = arith.constant 0 : i32
    return %arg0, %c0_i32 : i32, i32
  }
}

</mosaic_0001>

<llo_original>
// kernel: tpu_custom_call.1
$region0: #{tpu_custom_call.1}
  #allocation0 [shape = 'u32[]', space=smem, size = 0x4, offset = 0x4, fixed_abs, tag = 'smem constant byte address 0x4 - core index']
  #allocation1 [shape = 'u32[144,128]{1,0:T(1,128)}', space=vmem, size = 0x12000, scoped, tag = 'internal scratch']
  %s0 = inlined_call_operand.hbm [shape: f32[40,128], index: 0, kind: input, shape index: {}]
  %s1 = inlined_call_operand.hbm [shape: bf16[128,256], index: 1, kind: input, shape index: {}]
  %s2 = inlined_call_operand.vmem [shape: f32[1,256], index: 2, kind: input, shape index: {}]
  %s3 = inlined_call_operand.hbm [shape: bf16[256,256], index: 3, kind: input, shape index: {}]
  %s4 = inlined_call_operand.vmem [shape: f32[1,256], index: 4, kind: input, shape index: {}]
  %s5 = inlined_call_operand.hbm [shape: bf16[256,128], index: 5, kind: input, shape index: {}]
  %s6 = inlined_call_operand.vmem [shape: f32[1,128], index: 6, kind: input, shape index: {}]
  %s7 = inlined_call_operand.hbm [shape: bf16[40,256], index: 7, kind: input, shape index: {}]
  %s8 = inlined_call_operand.hbm [shape: f32[40,128], index: 8, kind: output, shape index: {}]
  %s9 = sld [smem:[#allocation0]]
  $region62: #{tpu_custom_call.1} parent=0
    _
  %s11 = ssub.s32 1, %s9
  %s12 = scalar_select 0, %s11, %s9
  $region1: #{tpu_custom_call.1} parent=0
    #allocation2 [shape = 'u8[20480]{0}', space=vmem, size = 0x5000, scoped, tag = 'input window, operand 0, single buffered']
    #allocation3 [shape = 's32[1]{0}', space=sflag, size = 0x4, scoped, tag = 'scoped memory for tpu_custom_call.1']
    #allocation4 [shape = 's32[1]{0}', space=sflag, size = 0x4, scoped, tag = 'scoped memory for tpu_custom_call.1']
    #allocation5 [shape = 'u8[65536]{0}', space=vmem, size = 0x10000, scoped, tag = 'input window, operand 1, single buffered']
    #allocation6 [shape = 's32[1]{0}', space=sflag, size = 0x4, scoped, tag = 'scoped memory for tpu_custom_call.1']
    #allocation7 [shape = 'u8[131072]{0}', space=vmem, size = 0x20000, scoped, tag = 'input window, operand 3, single buffered']
    #allocation8 [shape = 'u8[65536]{0}', space=vmem, size = 0x10000, scoped, tag = 'input window, operand 5, single buffered']
    #allocation9 [shape = 's32[1]{0}', space=sflag, size = 0x4, scoped, tag = 'scoped memory for tpu_custom_call.1']
    #allocation10 [shape = 'u8[20480]{0}', space=vmem, size = 0x5000, scoped, tag = 'input window, operand 7, single buffered']
    #allocation11 [shape = 'u8[20480]{0}', space=vmem, size = 0x5000, scoped, tag = 'output window, operand 0, single buffered']
    %13 = vsyncpa [#allocation3], 0
    %14 = vsyncpa [#allocation6], 0
    %15 = vsyncpa [#allocation9], 0
    %16 = vsyncpa [#allocation4], 0
    // Predicated region
    $region2: #{tpu_custom_call.1} parent=1 // pred_check
      _
    $region3: #{tpu_custom_call.1} parent=1 // pred_check_branch
      %18 = sbr.rel (0) target = $region5
    $region4: #{tpu_custom_call.1} parent=1 // pred_region
      %s20 = ssub.s32 640, 640
      %21 = vsyncadd [#allocation3], %s20
      %s22 = sshll.u32 [#allocation2], 4
      %s23 = int_to_ptr.vmem [resolvable:$true] %s22
      %28 = dma.hbm_to_vmem [thread:$0]  %s0, 640, %s23, [#allocation3], 128, 128, 8
    $region5: #{tpu_custom_call.1} parent=1 // pred_fallthru
      _
    // Predicated region
    $region6: #{tpu_custom_call.1} parent=1 // pred_check
      _
    $region7: #{tpu_custom_call.1} parent=1 // pred_check_branch
      %30 = sbr.rel (0) target = $region9
    $region8: #{tpu_custom_call.1} parent=1 // pred_region
      %s32 = ssub.s32 2048, 2048
      %33 = vsyncadd [#allocation6], %s32
      %s34 = sshll.u32 [#allocation5], 4
      %s35 = int_to_ptr.vmem [resolvable:$true] %s34
      %40 = dma.hbm_to_vmem [thread:$0]  %s1, 2048, %s35, [#allocation6], 128, 128, 8
    $region9: #{tpu_custom_call.1} parent=1 // pred_fallthru
      _
    // Predicated region
    $region10: #{tpu_custom_call.1} parent=1 // pred_check
      _
    $region11: #{tpu_custom_call.1} parent=1 // pred_check_branch
      %42 = sbr.rel (0) target = $region13
    $region12: #{tpu_custom_call.1} parent=1 // pred_region
      _
    $region13: #{tpu_custom_call.1} parent=1 // pred_fallthru
      _
    // Predicated region
    $region14: #{tpu_custom_call.1} parent=1 // pred_check
      _
    $region15: #{tpu_custom_call.1} parent=1 // pred_check_branch
      %44 = sbr.rel (0) target = $region17
    $region16: #{tpu_custom_call.1} parent=1 // pred_region
      %s46 = ssub.s32 4096, 4096
      %47 = vsyncadd [#allocation6], %s46
      %s48 = sshll.u32 [#allocation7], 4
      %s49 = int_to_ptr.vmem [resolvable:$true] %s48
      %54 = dma.hbm_to_vmem [thread:$0]  %s3, 4096, %s49, [#allocation6], 128, 128, 8
    $region17: #{tpu_custom_call.1} parent=1 // pred_fallthru
      _
    // Predicated region
    $region18: #{tpu_custom_call.1} parent=1 // pred_check
      _
    $region19: #{tpu_custom_call.1} parent=1 // pred_check_branch
      %56 = sbr.rel (0) target = $region21
    $region20: #{tpu_custom_call.1} parent=1 // pred_region
      _
    $region21: #{tpu_custom_call.1} parent=1 // pred_fallthru
      _
    // Predicated region
    $region22: #{tpu_custom_call.1} parent=1 // pred_check
      _
    $region23: #{tpu_custom_call.1} parent=1 // pred_check_branch
      %58 = sbr.rel (0) target = $region25
    $region24: #{tpu_custom_call.1} parent=1 // pred_region
      %s60 = ssub.s32 2048, 2048
      %61 = vsyncadd [#allocation9], %s60
      %s62 = sshll.u32 [#allocation8], 4
      %s63 = int_to_ptr.vmem [resolvable:$true] %s62
      %68 = dma.hbm_to_vmem [thread:$0]  %s5, 2048, %s63, [#allocation9], 64, 64, 4
    $region25: #{tpu_custom_call.1} parent=1 // pred_fallthru
      _
    // Predicated region
    $region26: #{tpu_custom_call.1} parent=1 // pred_check
      _
    $region27: #{tpu_custom_call.1} parent=1 // pred_check_branch
      %70 = sbr.rel (0) target = $region29
    $region28: #{tpu_custom_call.1} parent=1 // pred_region
      _
    $region29: #{tpu_custom_call.1} parent=1 // pred_fallthru
      _
    // Predicated region
    $region30: #{tpu_custom_call.1} parent=1 // pred_check
      _
    $region31: #{tpu_custom_call.1} parent=1 // pred_check_branch
      %72 = sbr.rel (0) target = $region33
    $region32: #{tpu_custom_call.1} parent=1 // pred_region
      %s74 = ssub.s32 640, 640
      %75 = vsyncadd [#allocation9], %s74
      %s76 = sshll.u32 [#allocation10], 4
      %s77 = int_to_ptr.vmem [resolvable:$true] %s76
      %82 = dma.hbm_to_vmem [thread:$0]  %s7, 640, %s77, [#allocation9], 128, 128, 8
    $region33: #{tpu_custom_call.1} parent=1 // pred_fallthru
      _
    // Predicated region
    $region34: #{tpu_custom_call.1} parent=1 // pred_check
      _
    $region35: #{tpu_custom_call.1} parent=1 // pred_check_branch
      %84 = sbr.rel (0) target = $region37
    $region36: #{tpu_custom_call.1} parent=1 // pred_region
      %85 = dma.done [#allocation3], 640
    $region37: #{tpu_custom_call.1} parent=1 // pred_fallthru
      _
    // Predicated region
    $region38: #{tpu_custom_call.1} parent=1 // pred_check
      _
    $region39: #{tpu_custom_call.1} parent=1 // pred_check_branch
      %87 = sbr.rel (0) target = $region41
    $region40: #{tpu_custom_call.1} parent=1 // pred_region
      %88 = dma.done [#allocation6], 2048
    $region41: #{tpu_custom_call.1} parent=1 // pred_fallthru
      _
    // Predicated region
    $region42: #{tpu_custom_call.1} parent=1 // pred_check
      _
    $region43: #{tpu_custom_call.1} parent=1 // pred_check_branch
      %90 = sbr.rel (0) target = $region45
    $region44: #{tpu_custom_call.1} parent=1 // pred_region
      %91 = dma.done [#allocation6], 4096
    $region45: #{tpu_custom_call.1} parent=1 // pred_fallthru
      _
    // Predicated region
    $region46: #{tpu_custom_call.1} parent=1 // pred_check
      _
    $region47: #{tpu_custom_call.1} parent=1 // pred_check_branch
      %93 = sbr.rel (0) target = $region49
    $region48: #{tpu_custom_call.1} parent=1 // pred_region
      %94 = dma.done [#allocation9], 2048
    $region49: #{tpu_custom_call.1} parent=1 // pred_fallthru
      _
    // Predicated region
    $region50: #{tpu_custom_call.1} parent=1 // pred_check
      _
    $region51: #{tpu_custom_call.1} parent=1 // pred_check_branch
      %96 = sbr.rel (0) target = $region53
    $region52: #{tpu_custom_call.1} parent=1 // pred_region
      %97 = dma.done [#allocation9], 640
    $region53: #{tpu_custom_call.1} parent=1 // pred_fallthru
      _
    %v99 = vld [vmem:[#allocation2] sm:$0xff]
    %v100 = vld [vmem:[#allocation2 + $0x8] sm:$0xff]
    %v101 = vld [vmem:[#allocation2 + $0x10] sm:$0xff]
    %v102 = vld [vmem:[#allocation2 + $0x18] sm:$0xff]
    %v103 = vld [vmem:[#allocation2 + $0x20] sm:$0xff]
    %v104 = vpack.c.bf16 %v100, %v99
    %v105 = vpack.c.bf16 %v102, %v101
    %v106 = vpack.c.bf16 %v103, %v103
    %v107 = vld [vmem:[#allocation5] sm:$0xff]
    %v108 = vld [vmem:[#allocation5 + $0x8] sm:$0xff]
    %v109 = vld [vmem:[#allocation5 + $0x10] sm:$0xff]
    %v110 = vld [vmem:[#allocation5 + $0x18] sm:$0xff]
    %v111 = vld [vmem:[#allocation5 + $0x20] sm:$0xff]
    %v112 = vld [vmem:[#allocation5 + $0x28] sm:$0xff]
    %v113 = vld [vmem:[#allocation5 + $0x30] sm:$0xff]
    %v114 = vld [vmem:[#allocation5 + $0x38] sm:$0xff]
    %v115 = vld [vmem:[#allocation5 + $0x40] sm:$0xff]
    %v116 = vld [vmem:[#allocation5 + $0x48] sm:$0xff]
    %v117 = vld [vmem:[#allocation5 + $0x50] sm:$0xff]
    %v118 = vld [vmem:[#allocation5 + $0x58] sm:$0xff]
    %v119 = vld [vmem:[#allocation5 + $0x60] sm:$0xff]
    %v120 = vld [vmem:[#allocation5 + $0x68] sm:$0xff]
    %v121 = vld [vmem:[#allocation5 + $0x70] sm:$0xff]
    %v122 = vld [vmem:[#allocation5 + $0x78] sm:$0xff]
    %v123 = vld [vmem:[%s2] sm:$0x3]
    %v125 = vlaneseq
    %v126 = vshrl.u32 %v125, 7
    %v127 = vsub.s32 0, %v126
    %v128 = vrot.slane %v123, %v127
    %v129 = vlaneseq
    %v130 = vshrl.u32 %v129, 7
    %v131 = vsub.s32 1, %v130
    %v132 = vrot.slane %v123, %v131
    %v151 = vunpack.c.l.b16 %v107
    %v152 = vunpack.c.h.b16 %v107
    %v153 = vunpack.c.l.b16 %v108
    %v154 = vunpack.c.h.b16 %v108
    %v155 = vunpack.c.l.b16 %v109
    %v156 = vunpack.c.h.b16 %v109
    %v157 = vunpack.c.l.b16 %v110
    %v158 = vunpack.c.h.b16 %v110
    %v159 = vunpack.c.l.b16 %v111
    %v160 = vunpack.c.h.b16 %v111
    %v161 = vunpack.c.l.b16 %v112
    %v162 = vunpack.c.h.b16 %v112
    %v163 = vunpack.c.l.b16 %v113
    %v164 = vunpack.c.h.b16 %v113
    %v165 = vunpack.c.l.b16 %v114
    %v166 = vunpack.c.h.b16 %v114
    %v167 = vunpack.c.l.b16 %v115
    %v168 = vunpack.c.h.b16 %v115
    %v169 = vunpack.c.l.b16 %v116
    %v170 = vunpack.c.h.b16 %v116
    %v171 = vunpack.c.l.b16 %v117
    %v172 = vunpack.c.h.b16 %v117
    %v173 = vunpack.c.l.b16 %v118
    %v174 = vunpack.c.h.b16 %v118
    %v175 = vunpack.c.l.b16 %v119
    %v176 = vunpack.c.h.b16 %v119
    %v177 = vunpack.c.l.b16 %v120
    %v178 = vunpack.c.h.b16 %v120
    %v179 = vunpack.c.l.b16 %v121
    %v180 = vunpack.c.h.b16 %v121
    %v181 = vunpack.c.l.b16 %v122
    %v182 = vunpack.c.h.b16 %v122
    %v183 = vpack.c.b16 %v153, %v151
    %v184 = vpack.c.b16 %v154, %v152
    %v185 = vpack.c.b16 %v157, %v155
    %v186 = vpack.c.b16 %v158, %v156
    %v187 = vpack.c.b16 %v161, %v159
    %v188 = vpack.c.b16 %v162, %v160
    %v189 = vpack.c.b16 %v165, %v163
    %v190 = vpack.c.b16 %v166, %v164
    %v191 = vpack.c.b16 %v169, %v167
    %v192 = vpack.c.b16 %v170, %v168
    %v193 = vpack.c.b16 %v173, %v171
    %v194 = vpack.c.b16 %v174, %v172
    %v195 = vpack.c.b16 %v177, %v175
    %v196 = vpack.c.b16 %v178, %v176
    %v197 = vpack.c.b16 %v181, %v179
    %v198 = vpack.c.b16 %v182, %v180
    %215 = vmatprep.subr.bf16.mxu0 %v184
    %216 = vmatpush1.bf16.msra.mxu0 %v183
    %217 = vmatprep.subr.bf16.mxu0 %v186
    %218 = vmatpush1.bf16.msra.mxu0 %v185
    %219 = vmatprep.subr.bf16.mxu0 %v188
    %220 = vmatpush1.bf16.msra.mxu0 %v187
    %221 = vmatprep.subr.bf16.mxu0 %v190
    %222 = vmatpush1.bf16.msra.mxu0 %v189
    %223 = vmatprep.subr.bf16.mxu0 %v192
    %224 = vmatpush1.bf16.msra.mxu0 %v191
    %225 = vmatprep.subr.bf16.mxu0 %v194
    %226 = vmatpush1.bf16.msra.mxu0 %v193
    %227 = vmatprep.subr.bf16.mxu0 %v196
    %228 = vmatpush1.bf16.msra.mxu0 %v195
    %229 = vmatprep.subr.bf16.mxu0 %v198
    %230 = vmatpush1.bf16.msra.mxu0 %v197
    %231 = vmatprep.subr.bf16.mxu0 0
    %232 = vmatpush1.bf16.msra.mxu0 0
    %233 = vmatprep.subr.bf16.mxu0 0
    %234 = vmatpush1.bf16.msra.mxu0 0
    %235 = vmatprep.subr.bf16.mxu0 0
    %236 = vmatpush1.bf16.msra.mxu0 0
    %237 = vmatprep.subr.bf16.mxu0 0
    %238 = vmatpush1.bf16.msra.mxu0 0
    %239 = vmatprep.subr.bf16.mxu0 0
    %240 = vmatpush1.bf16.msra.mxu0 0
    %241 = vmatprep.subr.bf16.mxu0 0
    %242 = vmatpush1.bf16.msra.mxu0 0
    %243 = vmatprep.subr.bf16.mxu0 0
    %244 = vmatpush1.bf16.msra.mxu0 0
    %245 = vmatprep.subr.bf16.mxu0 0
    %246 = vmatpush1.bf16.msra.mxu0 0
    %247 = vmatprep.mubr.bf16.mxu0 0
    %248 = vmatmul.mubr.bf16.gmra.mrb[0].mxu0 %v104
    %v249 = vpop.f32.mrb[0].mxu0
    %v250 = vadd.f32 %v128, %v249
    %v251 = vpop.f32.mrb[0].mxu0
    %v252 = vadd.f32 %v132, %v251
    %v253 = vpop.f32.mrb[0].mxu0
    %v254 = vadd.f32 %v128, %v253
    %v255 = vpop.f32.mrb[0].mxu0
    %v256 = vadd.f32 %v132, %v255
    %257 = vmatprep.mubr.bf16.mxu0 0
    %258 = vmatmul.mubr.bf16.gmra.mrb[0].mxu0 %v105
    %v259 = vpop.f32.mrb[0].mxu0
    %v260 = vadd.f32 %v128, %v259
    %v261 = vpop.f32.mrb[0].mxu0
    %v262 = vadd.f32 %v132, %v261
    %v263 = vpop.f32.mrb[0].mxu0
    %v264 = vadd.f32 %v128, %v263
    %v265 = vpop.f32.mrb[0].mxu0
    %v266 = vadd.f32 %v132, %v265
    %267 = vmatprep.mubr.bf16.mxu0 0
    %268 = vmatmul.mubr.bf16.gmra.mrb[0].mxu0 %v106
    %v269 = vpop.f32.mrb[0].mxu0
    %v270 = vadd.f32 %v128, %v269
    %v271 = vpop.f32.mrb[0].mxu0
    %v272 = vadd.f32 %v132, %v271
    %v273 = vpop.f32.mrb[0].mxu0
    %v274 = vpop.f32.mrb[0].mxu0
    %275 = vdwg.mxu0
    %v276 = vmul.f32 %v250, 0.5
    %v277 = vmul.f32 %v252, 0.5
    %v278 = vmul.f32 %v254, 0.5
    %v279 = vmul.f32 %v256, 0.5
    %v280 = vmul.f32 %v260, 0.5
    %v281 = vmul.f32 %v262, 0.5
    %v282 = vmul.f32 %v264, 0.5
    %v283 = vmul.f32 %v266, 0.5
    %v284 = vmul.f32 %v270, 0.5
    %v285 = vmul.f32 %v272, 0.5
    %v286 = vmul.f32 %v250, 0.044715
    %v287 = vmul.f32 %v252, 0.044715
    %v288 = vmul.f32 %v254, 0.044715
    %v289 = vmul.f32 %v256, 0.044715
    %v290 = vmul.f32 %v260, 0.044715
    %v291 = vmul.f32 %v262, 0.044715
    %v292 = vmul.f32 %v264, 0.044715
    %v293 = vmul.f32 %v266, 0.044715
    %v294 = vmul.f32 %v270, 0.044715
    %v295 = vmul.f32 %v272, 0.044715
    %v296 = vmul.f32 %v286, %v250
    %v297 = vmul.f32 %v287, %v252
    %v298 = vmul.f32 %v288, %v254
    %v299 = vmul.f32 %v289, %v256
    %v300 = vmul.f32 %v290, %v260
    %v301 = vmul.f32 %v291, %v262
    %v302 = vmul.f32 %v292, %v264
    %v303 = vmul.f32 %v293, %v266
    %v304 = vmul.f32 %v294, %v270
    %v305 = vmul.f32 %v295, %v272
    %v306 = vmul.f32 %v296, %v250
    %v307 = vmul.f32 %v297, %v252
    %v308 = vmul.f32 %v298, %v254
    %v309 = vmul.f32 %v299, %v256
    %v310 = vmul.f32 %v300, %v260
    %v311 = vmul.f32 %v301, %v262
    %v312 = vmul.f32 %v302, %v264
    %v313 = vmul.f32 %v303, %v266
    %v314 = vmul.f32 %v304, %v270
    %v315 = vmul.f32 %v305, %v272
    %v316 = vadd.f32 %v250, %v306
    %v317 = vadd.f32 %v252, %v307
    %v318 = vadd.f32 %v254, %v308
    %v319 = vadd.f32 %v256, %v309
    %v320 = vadd.f32 %v260, %v310
    %v321 = vadd.f32 %v262, %v311
    %v322 = vadd.f32 %v264, %v312
    %v323 = vadd.f32 %v266, %v313
    %v324 = vadd.f32 %v270, %v314
    %v325 = vadd.f32 %v272, %v315
    %v326 = vmul.f32 %v316, 0.7978846
    %v327 = vmul.f32 %v317, 0.7978846
    %v328 = vmul.f32 %v318, 0.7978846
    %v329 = vmul.f32 %v319, 0.7978846
    %v330 = vmul.f32 %v320, 0.7978846
    %v331 = vmul.f32 %v321, 0.7978846
    %v332 = vmul.f32 %v322, 0.7978846
    %v333 = vmul.f32 %v323, 0.7978846
    %v334 = vmul.f32 %v324, 0.7978846
    %v335 = vmul.f32 %v325, 0.7978846
    %v336 = vtanh.pop %v326
    %v337 = vtanh.pop %v327
    %v338 = vtanh.pop %v328
    %v339 = vtanh.pop %v329
    %v340 = vtanh.pop %v330
    %v341 = vtanh.pop %v331
    %v342 = vtanh.pop %v332
    %v343 = vtanh.pop %v333
    %v344 = vtanh.pop %v334
    %v345 = vtanh.pop %v335
    %v346 = vadd.f32 %v336, 1.0
    %v347 = vadd.f32 %v337, 1.0
    %v348 = vadd.f32 %v338, 1.0
    %v349 = vadd.f32 %v339, 1.0
    %v350 = vadd.f32 %v340, 1.0
    %v351 = vadd.f32 %v341, 1.0
    %v352 = vadd.f32 %v342, 1.0
    %v353 = vadd.f32 %v343, 1.0
    %v354 = vadd.f32 %v344, 1.0
    %v355 = vadd.f32 %v345, 1.0
    %v356 = vmul.f32 %v276, %v346
    %v357 = vmul.f32 %v277, %v347
    %v358 = vmul.f32 %v278, %v348
    %v359 = vmul.f32 %v279, %v349
    %v360 = vmul.f32 %v280, %v350
    %v361 = vmul.f32 %v281, %v351
    %v362 = vmul.f32 %v282, %v352
    %v363 = vmul.f32 %v283, %v353
    %v364 = vmul.f32 %v284, %v354
    %v365 = vmul.f32 %v285, %v355
    %v366 = vpack.c.bf16 %v358, %v356
    %v367 = vpack.c.bf16 %v359, %v357
    %v368 = vpack.c.bf16 %v362, %v360
    %v369 = vpack.c.bf16 %v363, %v361
    %v370 = vpack.c.bf16 %v364, %v364
    %v371 = vpack.c.bf16 %v365, %v365
    %v372 = vld [vmem:[#allocation7] sm:$0xff]
    %v373 = vld [vmem:[#allocation7 + $0x8] sm:$0xff]
    %v374 = vld [vmem:[#allocation7 + $0x10] sm:$0xff]
    %v375 = vld [vmem:[#allocation7 + $0x18] sm:$0xff]
    %v376 = vld [vmem:[#allocation7 + $0x20] sm:$0xff]
    %v377 = vld [vmem:[#allocation7 + $0x28] sm:$0xff]
    %v378 = vld [vmem:[#allocation7 + $0x30] sm:$0xff]
    %v379 = vld [vmem:[#allocation7 + $0x38] sm:$0xff]
    %v380 = vld [vmem:[#allocation7 + $0x40] sm:$0xff]
    %v381 = vld [vmem:[#allocation7 + $0x48] sm:$0xff]
    %v382 = vld [vmem:[#allocation7 + $0x50] sm:$0xff]
    %v383 = vld [vmem:[#allocation7 + $0x58] sm:$0xff]
    %v384 = vld [vmem:[#allocation7 + $0x60] sm:$0xff]
    %v385 = vld [vmem:[#allocation7 + $0x68] sm:$0xff]
    %v386 = vld [vmem:[#allocation7 + $0x70] sm:$0xff]
    %v387 = vld [vmem:[#allocation7 + $0x78] sm:$0xff]
    %v388 = vld [vmem:[#allocation7 + $0x80] sm:$0xff]
    %v389 = vld [vmem:[#allocation7 + $0x88] sm:$0xff]
    %v390 = vld [vmem:[#allocation7 + $0x90] sm:$0xff]
    %v391 = vld [vmem:[#allocation7 + $0x98] sm:$0xff]
    %v392 = vld [vmem:[#allocation7 + $0xa0] sm:$0xff]
    %v393 = vld [vmem:[#allocation7 + $0xa8] sm:$0xff]
    %v394 = vld [vmem:[#allocation7 + $0xb0] sm:$0xff]
    %v395 = vld [vmem:[#allocation7 + $0xb8] sm:$0xff]
    %v396 = vld [vmem:[#allocation7 + $0xc0] sm:$0xff]
    %v397 = vld [vmem:[#allocation7 + $0xc8] sm:$0xff]
    %v398 = vld [vmem:[#allocation7 + $0xd0] sm:$0xff]
    %v399 = vld [vmem:[#allocation7 + $0xd8] sm:$0xff]
    %v400 = vld [vmem:[#allocation7 + $0xe0] sm:$0xff]
    %v401 = vld [vmem:[#allocation7 + $0xe8] sm:$0xff]
    %v402 = vld [vmem:[#allocation7 + $0xf0] sm:$0xff]
    %v403 = vld [vmem:[#allocation7 + $0xf8] sm:$0xff]
    %v404 = vld [vmem:[%s4] sm:$0x3]
    %v406 = vlaneseq
    %v407 = vshrl.u32 %v406, 7
    %v408 = vsub.s32 0, %v407
    %v409 = vrot.slane %v404, %v408
    %v410 = vlaneseq
    %v411 = vshrl.u32 %v410, 7
    %v412 = vsub.s32 1, %v411
    %v413 = vrot.slane %v404, %v412
    %v448 = vunpack.c.l.b16 %v372
    %v449 = vunpack.c.h.b16 %v372
    %v450 = vunpack.c.l.b16 %v373
    %v451 = vunpack.c.h.b16 %v373
    %v452 = vunpack.c.l.b16 %v374
    %v453 = vunpack.c.h.b16 %v374
    %v454 = vunpack.c.l.b16 %v375
    %v455 = vunpack.c.h.b16 %v375
    %v456 = vunpack.c.l.b16 %v376
    %v457 = vunpack.c.h.b16 %v376
    %v458 = vunpack.c.l.b16 %v377
    %v459 = vunpack.c.h.b16 %v377
    %v460 = vunpack.c.l.b16 %v378
    %v461 = vunpack.c.h.b16 %v378
    %v462 = vunpack.c.l.b16 %v379
    %v463 = vunpack.c.h.b16 %v379
    %v464 = vunpack.c.l.b16 %v380
    %v465 = vunpack.c.h.b16 %v380
    %v466 = vunpack.c.l.b16 %v381
    %v467 = vunpack.c.h.b16 %v381
    %v468 = vunpack.c.l.b16 %v382
    %v469 = vunpack.c.h.b16 %v382
    %v470 = vunpack.c.l.b16 %v383
    %v471 = vunpack.c.h.b16 %v383
    %v472 = vunpack.c.l.b16 %v384
    %v473 = vunpack.c.h.b16 %v384
    %v474 = vunpack.c.l.b16 %v385
    %v475 = vunpack.c.h.b16 %v385
    %v476 = vunpack.c.l.b16 %v386
    %v477 = vunpack.c.h.b16 %v386
    %v478 = vunpack.c.l.b16 %v387
    %v479 = vunpack.c.h.b16 %v387
    %v480 = vunpack.c.l.b16 %v388
    %v481 = vunpack.c.h.b16 %v388
    %v482 = vunpack.c.l.b16 %v389
    %v483 = vunpack.c.h.b16 %v389
    %v484 = vunpack.c.l.b16 %v390
    %v485 = vunpack.c.h.b16 %v390
    %v486 = vunpack.c.l.b16 %v391
    %v487 = vunpack.c.h.b16 %v391
    %v488 = vunpack.c.l.b16 %v392
    %v489 = vunpack.c.h.b16 %v392
    %v490 = vunpack.c.l.b16 %v393
    %v491 = vunpack.c.h.b16 %v393
    %v492 = vunpack.c.l.b16 %v394
    %v493 = vunpack.c.h.b16 %v394
    %v494 = vunpack.c.l.b16 %v395
    %v495 = vunpack.c.h.b16 %v395
    %v496 = vunpack.c.l.b16 %v396
    %v497 = vunpack.c.h.b16 %v396
    %v498 = vunpack.c.l.b16 %v397
    %v499 = vunpack.c.h.b16 %v397
    %v500 = vunpack.c.l.b16 %v398
    %v501 = vunpack.c.h.b16 %v398
    %v502 = vunpack.c.l.b16 %v399
    %v503 = vunpack.c.h.b16 %v399
    %v504 = vunpack.c.l.b16 %v400
    %v505 = vunpack.c.h.b16 %v400
    %v506 = vunpack.c.l.b16 %v401
    %v507 = vunpack.c.h.b16 %v401
    %v508 = vunpack.c.l.b16 %v402
    %v509 = vunpack.c.h.b16 %v402
    %v510 = vunpack.c.l.b16 %v403
    %v511 = vunpack.c.h.b16 %v403
    %v512 = vpack.c.b16 %v450, %v448
    %v513 = vpack.c.b16 %v451, %v449
    %v514 = vpack.c.b16 %v454, %v452
    %v515 = vpack.c.b16 %v455, %v453
    %v516 = vpack.c.b16 %v458, %v456
    %v517 = vpack.c.b16 %v459, %v457
    %v518 = vpack.c.b16 %v462, %v460
    %v519 = vpack.c.b16 %v463, %v461
    %v520 = vpack.c.b16 %v466, %v464
    %v521 = vpack.c.b16 %v467, %v465
    %v522 = vpack.c.b16 %v470, %v468
    %v523 = vpack.c.b16 %v471, %v469
    %v524 = vpack.c.b16 %v474, %v472
    %v525 = vpack.c.b16 %v475, %v473
    %v526 = vpack.c.b16 %v478, %v476
    %v527 = vpack.c.b16 %v479, %v477
    %v528 = vpack.c.b16 %v482, %v480
    %v529 = vpack.c.b16 %v483, %v481
    %v530 = vpack.c.b16 %v486, %v484
    %v531 = vpack.c.b16 %v487, %v485
    %v532 = vpack.c.b16 %v490, %v488
    %v533 = vpack.c.b16 %v491, %v489
    %v534 = vpack.c.b16 %v494, %v492
    %v535 = vpack.c.b16 %v495, %v493
    %v536 = vpack.c.b16 %v498, %v496
    %v537 = vpack.c.b16 %v499, %v497
    %v538 = vpack.c.b16 %v502, %v500
    %v539 = vpack.c.b16 %v503, %v501
    %v540 = vpack.c.b16 %v506, %v504
    %v541 = vpack.c.b16 %v507, %v505
    %v542 = vpack.c.b16 %v510, %v508
    %v543 = vpack.c.b16 %v511, %v509
    %576 = vmatprep.subr.bf16.mxu0 %v513
    %577 = vmatpush1.bf16.msra.mxu0 %v512
    %578 = vmatprep.subr.bf16.mxu0 %v515
    %579 = vmatpush1.bf16.msra.mxu0 %v514
    %580 = vmatprep.subr.bf16.mxu0 %v517
    %581 = vmatpush1.bf16.msra.mxu0 %v516
    %582 = vmatprep.subr.bf16.mxu0 %v519
    %583 = vmatpush1.bf16.msra.mxu0 %v518
    %584 = vmatprep.subr.bf16.mxu0 %v521
    %585 = vmatpush1.bf16.msra.mxu0 %v520
    %586 = vmatprep.subr.bf16.mxu0 %v523
    %587 = vmatpush1.bf16.msra.mxu0 %v522
    %588 = vmatprep.subr.bf16.mxu0 %v525
    %589 = vmatpush1.bf16.msra.mxu0 %v524
    %590 = vmatprep.subr.bf16.mxu0 %v527
    %591 = vmatpush1.bf16.msra.mxu0 %v526
    %592 = vmatprep.subr.bf16.mxu0 %v529
    %593 = vmatpush1.bf16.msra.mxu0 %v528
    %594 = vmatprep.subr.bf16.mxu0 %v531
    %595 = vmatpush1.bf16.msra.mxu0 %v530
    %596 = vmatprep.subr.bf16.mxu0 %v533
    %597 = vmatpush1.bf16.msra.mxu0 %v532
    %598 = vmatprep.subr.bf16.mxu0 %v535
    %599 = vmatpush1.bf16.msra.mxu0 %v534
    %600 = vmatprep.subr.bf16.mxu0 %v537
    %601 = vmatpush1.bf16.msra.mxu0 %v536
    %602 = vmatprep.subr.bf16.mxu0 %v539
    %603 = vmatpush1.bf16.msra.mxu0 %v538
    %604 = vmatprep.subr.bf16.mxu0 %v541
    %605 = vmatpush1.bf16.msra.mxu0 %v540
    %606 = vmatprep.subr.bf16.mxu0 %v543
    %607 = vmatpush1.bf16.msra.mxu0 %v542
    %608 = vmatprep.mubr.bf16.mxu0 %v367
    %609 = vmatmul.mubr.bf16.gmra.mrb[0].mxu0 %v366
    %v610 = vpop.f32.mrb[0].mxu0
    %v611 = vadd.f32 %v409, %v610
    %v612 = vpop.f32.mrb[0].mxu0
    %v613 = vadd.f32 %v413, %v612
    %v614 = vpop.f32.mrb[0].mxu0
    %v615 = vadd.f32 %v409, %v614
    %v616 = vpop.f32.mrb[0].mxu0
    %v617 = vadd.f32 %v413, %v616
    %618 = vmatprep.mubr.bf16.mxu0 %v369
    %619 = vmatmul.mubr.bf16.gmra.mrb[0].mxu0 %v368
    %v620 = vpop.f32.mrb[0].mxu0
    %v621 = vadd.f32 %v409, %v620
    %v622 = vpop.f32.mrb[0].mxu0
    %v623 = vadd.f32 %v413, %v622
    %v624 = vpop.f32.mrb[0].mxu0
    %v625 = vadd.f32 %v409, %v624
    %v626 = vpop.f32.mrb[0].mxu0
    %v627 = vadd.f32 %v413, %v626
    %628 = vmatprep.mubr.bf16.mxu0 %v371
    %629 = vmatmul.mubr.bf16.gmra.mrb[0].mxu0 %v370
    %v630 = vpop.f32.mrb[0].mxu0
    %v631 = vadd.f32 %v409, %v630
    %v632 = vpop.f32.mrb[0].mxu0
    %v633 = vadd.f32 %v413, %v632
    %v634 = vpop.f32.mrb[0].mxu0
    %v635 = vpop.f32.mrb[0].mxu0
    %636 = vdwg.mxu0
    %v637 = vld [vmem:[#allocation10] sm:$0xff]
    %v638 = vld [vmem:[#allocation10 + $0x8] sm:$0xff]
    %v639 = vld [vmem:[#allocation10 + $0x10] sm:$0xff]
    %v640 = vld [vmem:[#allocation10 + $0x18] sm:$0xff]
    %v641 = vld [vmem:[#allocation10 + $0x20] sm:$0xff]
    %v642 = vunpack.c.l.bf16 %v637
    %v643 = vunpack.c.h.bf16 %v637
    %v644 = vunpack.c.l.bf16 %v638
    %v645 = vunpack.c.h.bf16 %v638
    %v646 = vunpack.c.l.bf16 %v639
    %v647 = vunpack.c.h.bf16 %v639
    %v648 = vunpack.c.l.bf16 %v640
    %v649 = vunpack.c.h.bf16 %v640
    %v650 = vunpack.c.l.bf16 %v641
    %v651 = vunpack.c.h.bf16 %v641
    %v652 = vadd.f32 %v611, %v642
    %v653 = vadd.f32 %v613, %v643
    %v654 = vadd.f32 %v615, %v644
    %v655 = vadd.f32 %v617, %v645
    %v656 = vadd.f32 %v621, %v646
    %v657 = vadd.f32 %v623, %v647
    %v658 = vadd.f32 %v625, %v648
    %v659 = vadd.f32 %v627, %v649
    %v660 = vadd.f32 %v631, %v650
    %v661 = vadd.f32 %v633, %v651
    %v662 = vmul.f32 %v652, 0.5
    %v663 = vmul.f32 %v653, 0.5
    %v664 = vmul.f32 %v654, 0.5
    %v665 = vmul.f32 %v655, 0.5
    %v666 = vmul.f32 %v656, 0.5
    %v667 = vmul.f32 %v657, 0.5
    %v668 = vmul.f32 %v658, 0.5
    %v669 = vmul.f32 %v659, 0.5
    %v670 = vmul.f32 %v660, 0.5
    %v671 = vmul.f32 %v661, 0.5
    %v672 = vmul.f32 %v652, 0.044715
    %v673 = vmul.f32 %v653, 0.044715
    %v674 = vmul.f32 %v654, 0.044715
    %v675 = vmul.f32 %v655, 0.044715
    %v676 = vmul.f32 %v656, 0.044715
    %v677 = vmul.f32 %v657, 0.044715
    %v678 = vmul.f32 %v658, 0.044715
    %v679 = vmul.f32 %v659, 0.044715
    %v680 = vmul.f32 %v660, 0.044715
    %v681 = vmul.f32 %v661, 0.044715
    %v682 = vmul.f32 %v672, %v652
    %v683 = vmul.f32 %v673, %v653
    %v684 = vmul.f32 %v674, %v654
    %v685 = vmul.f32 %v675, %v655
    %v686 = vmul.f32 %v676, %v656
    %v687 = vmul.f32 %v677, %v657
    %v688 = vmul.f32 %v678, %v658
    %v689 = vmul.f32 %v679, %v659
    %v690 = vmul.f32 %v680, %v660
    %v691 = vmul.f32 %v681, %v661
    %v692 = vmul.f32 %v682, %v652
    %v693 = vmul.f32 %v683, %v653
    %v694 = vmul.f32 %v684, %v654
    %v695 = vmul.f32 %v685, %v655
    %v696 = vmul.f32 %v686, %v656
    %v697 = vmul.f32 %v687, %v657
    %v698 = vmul.f32 %v688, %v658
    %v699 = vmul.f32 %v689, %v659
    %v700 = vmul.f32 %v690, %v660
    %v701 = vmul.f32 %v691, %v661
    %v702 = vadd.f32 %v652, %v692
    %v703 = vadd.f32 %v653, %v693
    %v704 = vadd.f32 %v654, %v694
    %v705 = vadd.f32 %v655, %v695
    %v706 = vadd.f32 %v656, %v696
    %v707 = vadd.f32 %v657, %v697
    %v708 = vadd.f32 %v658, %v698
    %v709 = vadd.f32 %v659, %v699
    %v710 = vadd.f32 %v660, %v700
    %v711 = vadd.f32 %v661, %v701
    %v712 = vmul.f32 %v702, 0.7978846
    %v713 = vmul.f32 %v703, 0.7978846
    %v714 = vmul.f32 %v704, 0.7978846
    %v715 = vmul.f32 %v705, 0.7978846
    %v716 = vmul.f32 %v706, 0.7978846
    %v717 = vmul.f32 %v707, 0.7978846
    %v718 = vmul.f32 %v708, 0.7978846
    %v719 = vmul.f32 %v709, 0.7978846
    %v720 = vmul.f32 %v710, 0.7978846
    %v721 = vmul.f32 %v711, 0.7978846
    %v722 = vtanh.pop %v712
    %v723 = vtanh.pop %v713
    %v724 = vtanh.pop %v714
    %v725 = vtanh.pop %v715
    %v726 = vtanh.pop %v716
    %v727 = vtanh.pop %v717
    %v728 = vtanh.pop %v718
    %v729 = vtanh.pop %v719
    %v730 = vtanh.pop %v720
    %v731 = vtanh.pop %v721
    %v732 = vadd.f32 %v722, 1.0
    %v733 = vadd.f32 %v723, 1.0
    %v734 = vadd.f32 %v724, 1.0
    %v735 = vadd.f32 %v725, 1.0
    %v736 = vadd.f32 %v726, 1.0
    %v737 = vadd.f32 %v727, 1.0
    %v738 = vadd.f32 %v728, 1.0
    %v739 = vadd.f32 %v729, 1.0
    %v740 = vadd.f32 %v730, 1.0
    %v741 = vadd.f32 %v731, 1.0
    %v742 = vmul.f32 %v662, %v732
    %v743 = vmul.f32 %v663, %v733
    %v744 = vmul.f32 %v664, %v734
    %v745 = vmul.f32 %v665, %v735
    %v746 = vmul.f32 %v666, %v736
    %v747 = vmul.f32 %v667, %v737
    %v748 = vmul.f32 %v668, %v738
    %v749 = vmul.f32 %v669, %v739
    %v750 = vmul.f32 %v670, %v740
    %v751 = vmul.f32 %v671, %v741
    %v752 = vpack.c.bf16 %v744, %v742
    %v753 = vpack.c.bf16 %v745, %v743
    %v754 = vpack.c.bf16 %v748, %v746
    %v755 = vpack.c.bf16 %v749, %v747
    %v756 = vpack.c.bf16 %v750, %v750
    %v757 = vpack.c.bf16 %v751, %v751
    %v758 = vld [vmem:[#allocation8] sm:$0xf]
    %v759 = vld [vmem:[#allocation8 + $0x4] sm:$0xf]
    %v760 = vld [vmem:[#allocation8 + $0x8] sm:$0xf]
    %v761 = vld [vmem:[#allocation8 + $0xc] sm:$0xf]
    %v762 = vld [vmem:[#allocation8 + $0x10] sm:$0xf]
    %v763 = vld [vmem:[#allocation8 + $0x14] sm:$0xf]
    %v764 = vld [vmem:[#allocation8 + $0x18] sm:$0xf]
    %v765 = vld [vmem:[#allocation8 + $0x1c] sm:$0xf]
    %v766 = vld [vmem:[#allocation8 + $0x20] sm:$0xf]
    %v767 = vld [vmem:[#allocation8 + $0x24] sm:$0xf]
    %v768 = vld [vmem:[#allocation8 + $0x28] sm:$0xf]
    %v769 = vld [vmem:[#allocation8 + $0x2c] sm:$0xf]
    %v770 = vld [vmem:[#allocation8 + $0x30] sm:$0xf]
    %v771 = vld [vmem:[#allocation8 + $0x34] sm:$0xf]
    %v772 = vld [vmem:[#allocation8 + $0x38] sm:$0xf]
    %v773 = vld [vmem:[#allocation8 + $0x3c] sm:$0xf]
    %v774 = vld [vmem:[#allocation8 + $0x40] sm:$0xf]
    %v775 = vld [vmem:[#allocation8 + $0x44] sm:$0xf]
    %v776 = vld [vmem:[#allocation8 + $0x48] sm:$0xf]
    %v777 = vld [vmem:[#allocation8 + $0x4c] sm:$0xf]
    %v778 = vld [vmem:[#allocation8 + $0x50] sm:$0xf]
    %v779 = vld [vmem:[#allocation8 + $0x54] sm:$0xf]
    %v780 = vld [vmem:[#allocation8 + $0x58] sm:$0xf]
    %v781 = vld [vmem:[#allocation8 + $0x5c] sm:$0xf]
    %v782 = vld [vmem:[#allocation8 + $0x60] sm:$0xf]
    %v783 = vld [vmem:[#allocation8 + $0x64] sm:$0xf]
    %v784 = vld [vmem:[#allocation8 + $0x68] sm:$0xf]
    %v785 = vld [vmem:[#allocation8 + $0x6c] sm:$0xf]
    %v786 = vld [vmem:[#allocation8 + $0x70] sm:$0xf]
    %v787 = vld [vmem:[#allocation8 + $0x74] sm:$0xf]
    %v788 = vld [vmem:[#allocation8 + $0x78] sm:$0xf]
    %v789 = vld [vmem:[#allocation8 + $0x7c] sm:$0xf]
    %v790 = vld [vmem:[%s6] sm:$0x1]
    %v792 = vlaneseq
    %v793 = vshrl.u32 %v792, 7
    %v794 = vsub.s32 0, %v793
    %v795 = vrot.slane %v790, %v794
    %v829 = vunpack.c.l.b16 %v758
    %v830 = vunpack.c.l.b16 %v759
    %v831 = vunpack.c.l.b16 %v760
    %v832 = vunpack.c.l.b16 %v761
    %v833 = vunpack.c.l.b16 %v762
    %v834 = vunpack.c.l.b16 %v763
    %v835 = vunpack.c.l.b16 %v764
    %v836 = vunpack.c.l.b16 %v765
    %v837 = vunpack.c.l.b16 %v766
    %v838 = vunpack.c.l.b16 %v767
    %v839 = vunpack.c.l.b16 %v768
    %v840 = vunpack.c.l.b16 %v769
    %v841 = vunpack.c.l.b16 %v770
    %v842 = vunpack.c.l.b16 %v771
    %v843 = vunpack.c.l.b16 %v772
    %v844 = vunpack.c.l.b16 %v773
    %v845 = vunpack.c.l.b16 %v774
    %v846 = vunpack.c.l.b16 %v775
    %v847 = vunpack.c.l.b16 %v776
    %v848 = vunpack.c.l.b16 %v777
    %v849 = vunpack.c.l.b16 %v778
    %v850 = vunpack.c.l.b16 %v779
    %v851 = vunpack.c.l.b16 %v780
    %v852 = vunpack.c.l.b16 %v781
    %v853 = vunpack.c.l.b16 %v782
    %v854 = vunpack.c.l.b16 %v783
    %v855 = vunpack.c.l.b16 %v784
    %v856 = vunpack.c.l.b16 %v785
    %v857 = vunpack.c.l.b16 %v786
    %v858 = vunpack.c.l.b16 %v787
    %v859 = vunpack.c.l.b16 %v788
    %v860 = vunpack.c.l.b16 %v789
    %v861 = vpack.c.b16 %v830, %v829
    %v862 = vpack.c.b16 %v832, %v831
    %v863 = vpack.c.b16 %v834, %v833
    %v864 = vpack.c.b16 %v836, %v835
    %v865 = vpack.c.b16 %v838, %v837
    %v866 = vpack.c.b16 %v840, %v839
    %v867 = vpack.c.b16 %v842, %v841
    %v868 = vpack.c.b16 %v844, %v843
    %v869 = vpack.c.b16 %v846, %v845
    %v870 = vpack.c.b16 %v848, %v847
    %v871 = vpack.c.b16 %v850, %v849
    %v872 = vpack.c.b16 %v852, %v851
    %v873 = vpack.c.b16 %v854, %v853
    %v874 = vpack.c.b16 %v856, %v855
    %v875 = vpack.c.b16 %v858, %v857
    %v876 = vpack.c.b16 %v860, %v859
    %893 = vmatprep.subr.bf16.mxu0 0
    %894 = vmatpush1.bf16.msra.mxu0 %v861
    %895 = vmatprep.subr.bf16.mxu0 0
    %896 = vmatpush1.bf16.msra.mxu0 %v862
    %897 = vmatprep.subr.bf16.mxu0 0
    %898 = vmatpush1.bf16.msra.mxu0 %v863
    %899 = vmatprep.subr.bf16.mxu0 0
    %900 = vmatpush1.bf16.msra.mxu0 %v864
    %901 = vmatprep.subr.bf16.mxu0 0
    %902 = vmatpush1.bf16.msra.mxu0 %v865
    %903 = vmatprep.subr.bf16.mxu0 0
    %904 = vmatpush1.bf16.msra.mxu0 %v866
    %905 = vmatprep.subr.bf16.mxu0 0
    %906 = vmatpush1.bf16.msra.mxu0 %v867
    %907 = vmatprep.subr.bf16.mxu0 0
    %908 = vmatpush1.bf16.msra.mxu0 %v868
    %909 = vmatprep.subr.bf16.mxu0 0
    %910 = vmatpush1.bf16.msra.mxu0 %v869
    %911 = vmatprep.subr.bf16.mxu0 0
    %912 = vmatpush1.bf16.msra.mxu0 %v870
    %913 = vmatprep.subr.bf16.mxu0 0
    %914 = vmatpush1.bf16.msra.mxu0 %v871
    %915 = vmatprep.subr.bf16.mxu0 0
    %916 = vmatpush1.bf16.msra.mxu0 %v872
    %917 = vmatprep.subr.bf16.mxu0 0
    %918 = vmatpush1.bf16.msra.mxu0 %v873
    %919 = vmatprep.subr.bf16.mxu0 0
    %920 = vmatpush1.bf16.msra.mxu0 %v874
    %921 = vmatprep.subr.bf16.mxu0 0
    %922 = vmatpush1.bf16.msra.mxu0 %v875
    %923 = vmatprep.subr.bf16.mxu0 0
    %924 = vmatpush1.bf16.msra.mxu0 %v876
    %925 = vmatprep.mubr.bf16.mxu0 %v753
    %926 = vmatmul.mubr.bf16.gmra.mrb[0].mxu0 %v752
    %v927 = vpop.f32.mrb[0].mxu0
    %v928 = vadd.f32 %v795, %v927
    %v929 = vpop.f32.mrb[0].mxu0
    %v930 = vpop.f32.mrb[0].mxu0
    %v931 = vadd.f32 %v795, %v930
    %v932 = vpop.f32.mrb[0].mxu0
    %933 = vmatprep.mubr.bf16.mxu0 %v755
    %934 = vmatmul.mubr.bf16.gmra.mrb[0].mxu0 %v754
    %v935 = vpop.f32.mrb[0].mxu0
    %v936 = vadd.f32 %v795, %v935
    %v937 = vpop.f32.mrb[0].mxu0
    %v938 = vpop.f32.mrb[0].mxu0
    %v939 = vadd.f32 %v795, %v938
    %v940 = vpop.f32.mrb[0].mxu0
    %941 = vmatprep.mubr.bf16.mxu0 %v757
    %942 = vmatmul.mubr.bf16.gmra.mrb[0].mxu0 %v756
    %v943 = vpop.f32.mrb[0].mxu0
    %v944 = vadd.f32 %v795, %v943
    %v945 = vpop.f32.mrb[0].mxu0
    %v946 = vpop.f32.mrb[0].mxu0
    %v947 = vpop.f32.mrb[0].mxu0
    %948 = vdwg.mxu0
    %949 = vst [vmem:[#allocation11] sm:$0xff] %v928
    %950 = vst [vmem:[#allocation11 + $0x8] sm:$0xff] %v931
    %951 = vst [vmem:[#allocation11 + $0x10] sm:$0xff] %v936
    %952 = vst [vmem:[#allocation11 + $0x18] sm:$0xff] %v939
    %953 = vst [vmem:[#allocation11 + $0x20] sm:$0xff] %v944
    // Predicated region
    $region54: #{tpu_custom_call.1} parent=1 // pred_check
      _
    $region55: #{tpu_custom_call.1} parent=1 // pred_check_branch
      %955 = sbr.rel (0) target = $region57
    $region56: #{tpu_custom_call.1} parent=1 // pred_region
      %s957 = ssub.s32 640, 640
      %958 = vsyncadd [#allocation4], %s957
      %s959 = sshll.u32 [#allocation11], 4
      %s960 = int_to_ptr.vmem [resolvable:$true] %s959
      %965 = dma.vmem_to_hbm [thread:$0]  %s960, 640, %s8, [#allocation4], 128, 128, 8
    $region57: #{tpu_custom_call.1} parent=1 // pred_fallthru
      _
    // Predicated region
    $region58: #{tpu_custom_call.1} parent=1 // pred_check
      _
    $region59: #{tpu_custom_call.1} parent=1 // pred_check_branch
      %967 = sbr.rel (0) target = $region61
    $region60: #{tpu_custom_call.1} parent=1 // pred_region
      %968 = dma.done [#allocation4], 640
    $region61: #{tpu_custom_call.1} parent=1 // pred_fallthru
      _
    %969 = vsyncpa [#allocation3], 1
    %970 = vsyncpa [#allocation6], 1
    %971 = vsyncpa [#allocation9], 1
    %972 = vsyncpa [#allocation4], 1

</llo_original>
